<compile_context>
chip_gen: v6e
topology: v6e:2x2x1
jax: 0.10.0
libtpu: 0.0.40
codegen_flags: <defaults>
</compile_context>

<pallas_src>
import jax
import jax.numpy as jnp
from jax.experimental import pallas as pl
from jax.experimental.pallas import tpu as pltpu


def _round_up(n, m):
    return ((n + m - 1) // m) * m


def _k_tile(hidden_size):
    # Real model size: TK=512 bf16 -> 2 x [(1536x512) + (512x~10240)] tiles ~= 23 MB of
    # double-buffered weights, inside the 48 MiB budget on v5e/v6e/v7x.
    # Small hidden sizes use 128 so the test still exercises the multi-step
    # streaming/accumulator path (grid > 1).
    return 512 if hidden_size > 512 else 128


def _mlp_kernel(x_ref, w1_ref, b1_ref, w2_ref, b2_ref, w3_ref, b3_ref, o_ref, acc_ref):
    """Grid step k:
         h1_k  = relu(x @ W1[:, k*TK:(k+1)*TK] + b1[k*TK:(k+1)*TK])   (B, TK)
         acc  += h1_k @ W2[k*TK:(k+1)*TK, :]                           (B, H)
       Last step:
         h2    = relu(acc + b2);  out = h2 @ W3 + b3
       Dropout (p=0.5) = identity (eval-mode semantics).
    """
    k = pl.program_id(0)

    @pl.when(k == 0)
    def _init():
        acc_ref[...] = jnp.zeros_like(acc_ref)

    # fc1 column tile + bias + relu (f32 accumulation on the MXU).
    x = x_ref[...].astype(jnp.bfloat16)
    h1 = jnp.dot(x, w1_ref[...], preferred_element_type=jnp.float32) + b1_ref[...]
    h1 = jnp.maximum(h1, 0.0)

    # fc2 partial: accumulate into the resident f32 accumulator.
    acc_ref[...] += jnp.dot(h1.astype(jnp.bfloat16), w2_ref[...],
                            preferred_element_type=jnp.float32)

    @pl.when(k == pl.num_programs(0) - 1)
    def _finalize():
        h2 = jnp.maximum(acc_ref[...] + b2_ref[...], 0.0)
        out = jnp.dot(h2.astype(jnp.bfloat16), w3_ref[...],
                      preferred_element_type=jnp.float32) + b3_ref[...]
        o_ref[...] = out.astype(o_ref.dtype)


def text_classifier_forward(x, params, *, block_k, output_size):
    """x: (B, input_size) float32. params: output of prepare_params.
    Returns (B, output_size) float32."""
    w1, b1, w2, b2, w3, b3 = (params["w1"], params["b1"], params["w2"],
                              params["b2"], params["w3"], params["b3"])
    batch, in_size = x.shape
    hidden_pad = w1.shape[1]
    out_pad = w3.shape[1]
    nk = hidden_pad // block_k

    grid_spec = pltpu.PrefetchScalarGridSpec(
        num_scalar_prefetch=0,
        grid=(nk,),
        in_specs=[
            pl.BlockSpec((batch, in_size), lambda k: (0, 0)),        # x: resident
            pl.BlockSpec((in_size, block_k), lambda k: (0, k)),      # W1 column tile
            pl.BlockSpec((1, block_k), lambda k: (0, k)),            # b1 tile
            pl.BlockSpec((block_k, hidden_pad), lambda k: (k, 0)),   # W2 row tile
            pl.BlockSpec((1, hidden_pad), lambda k: (0, 0)),         # b2: resident
            pl.BlockSpec((hidden_pad, out_pad), lambda k: (0, 0)),   # W3: resident
            pl.BlockSpec((1, out_pad), lambda k: (0, 0)),            # b3: resident
        ],
        out_specs=pl.BlockSpec((batch, out_pad), lambda k: (0, 0)),  # resident output
        scratch_shapes=[pltpu.VMEM((batch, hidden_pad), jnp.float32)],
    )

    # Advisory cost hint for the XLA scheduler around the custom call.
    flops = 2 * batch * (in_size * hidden_pad + hidden_pad * hidden_pad
                         + hidden_pad * out_pad)
    bytes_accessed = (x.size * 4
                      + (w1.size + w2.size + w3.size) * 2
                      + (b1.size + b2.size + b3.size) * 4
                      + batch * out_pad * 4)
    cost = pl.CostEstimate(flops=flops, transcendentals=0,
                           bytes_accessed=bytes_accessed)

    out = pl.pallas_call(
        _mlp_kernel,
        out_shape=jax.ShapeDtypeStruct((batch, out_pad), jnp.float32),
        grid_spec=grid_spec,
        compiler_params=pltpu.CompilerParams(
            dimension_semantics=("arbitrary",),   # K is a reduction axis
            vmem_limit_bytes=48 << 20,            # fits v7x's 64 MiB physical VMEM too
        ),
        cost_estimate=cost,
    )(x, w1, b1, w2, b2, w3, b3)

    return out[:, :output_size]


def init_params(key, input_size, hidden_size, output_size):
    """f32 master weights, nn.Linear-style U(-1/sqrt(fan_in), 1/sqrt(fan_in)) init,
    stored transposed vs PyTorch: (in_features, out_features)."""
    ks = jax.random.split(key, 6)

    def linear(kw, kb, fan_in, fan_out):
        bound = 1.0 / jnp.sqrt(jnp.float32(fan_in))
        w = jax.random.uniform(kw, (fan_in, fan_out), jnp.float32, -bound, bound)
        b = jax.random.uniform(kb, (1, fan_out), jnp.float32, -bound, bound)
        return w, b

    w1, b1 = linear(ks[0], ks[1], input_size, hidden_size)
    w2, b2 = linear(ks[2], ks[3], hidden_size, hidden_size)
    w3, b3 = linear(ks[4], ks[5], hidden_size, output_size)
    return {"w1": w1, "b1": b1, "w2": w2, "b2": b2, "w3": w3, "b3": b3}


def prepare_params(params, *, block_k):
    """One-time prep (hoisted out of the forward path):
       * pad hidden -> multiple of block_k, output -> multiple of 128 (zero pad is
         numerically inert through ReLU and the K-reduction),
       * cast weights to bf16 (halves HBM weight traffic); biases stay f32."""
    hidden = params["w1"].shape[1]
    out = params["w3"].shape[1]
    dh = _round_up(hidden, block_k) - hidden
    do = _round_up(out, 128) - out

    def pad_w(w, rows, cols):
        return jnp.pad(w, ((0, rows), (0, cols))).astype(jnp.bfloat16)

    def pad_b(b, cols):
        return jnp.pad(b, ((0, 0), (0, cols)))  # keep f32

    return {
        "w1": pad_w(params["w1"], 0, dh), "b1": pad_b(params["b1"], dh),
        "w2": pad_w(params["w2"], dh, dh), "b2": pad_b(params["b2"], dh),
        "w3": pad_w(params["w3"], dh, do), "b3": pad_b(params["b3"], do),
    }


def _reference(x, p):
    h1 = jnp.maximum(x @ p["w1"] + p["b1"], 0.0)
    h2 = jnp.maximum(h1 @ p["w2"] + p["b2"], 0.0)
    return h2 @ p["w3"] + p["b3"]


if __name__ == "__main__":
    # Scaled-down shapes consistent with the module (real: 1536 / 10000 / 95).
    BATCH, INPUT_SIZE, HIDDEN_SIZE, OUTPUT_SIZE = 8, 128, 256, 95

    key = jax.random.PRNGKey(0)
    k_x, k_p = jax.random.split(key)

    params_f32 = init_params(k_p, INPUT_SIZE, HIDDEN_SIZE, OUTPUT_SIZE)
    block_k = _k_tile(HIDDEN_SIZE)                       # 128 here -> 2 K-steps
    params = prepare_params(params_f32, block_k=block_k)

    # x['text_embedding'] equivalent: (B, input_size) float32.
    x = jax.random.normal(k_x, (BATCH, INPUT_SIZE), jnp.float32)

    y = text_classifier_forward(x, params, block_k=block_k, output_size=OUTPUT_SIZE)
    jax.block_until_ready(y)

    y_ref = _reference(x, params_f32)
    assert y.shape == (BATCH, OUTPUT_SIZE), y.shape
    max_err = float(jnp.max(jnp.abs(y - y_ref)))
    # bf16 weight streaming vs f32 reference -> loose but tight-enough tolerance.
    assert jnp.allclose(y, y_ref, atol=3e-2, rtol=3e-2), max_err

    print("KERNEL_OK")
</pallas_src>

<mosaic_0001>
module attributes {stable_mosaic.version = 11 : i64} {
  func.func @_mlp_kernel(%arg0: i32, %arg1: memref<8x128xf32, #tpu.memory_space<vmem>>, %arg2: memref<128x128xbf16, #tpu.memory_space<vmem>>, %arg3: memref<1x128xf32, #tpu.memory_space<vmem>>, %arg4: memref<128x256xbf16, #tpu.memory_space<vmem>>, %arg5: memref<1x256xf32, #tpu.memory_space<vmem>>, %arg6: memref<256x128xbf16, #tpu.memory_space<vmem>>, %arg7: memref<1x128xf32, #tpu.memory_space<vmem>>, %arg8: memref<8x128xf32, #tpu.memory_space<vmem>>, %arg9: memref<8x256xf32, #tpu.memory_space<vmem>>) attributes {dimension_semantics = [#tpu.dimension_semantics<arbitrary>], iteration_bounds = array<i64: 2>, scalar_prefetch = 0 : i64, scratch_operands = 1 : i64, tpu.core_type = #tpu.core_type<tc>, window_params = [{pipeline_mode = #tpu.pipeline_mode<synchronous>, transform_indices = @transform_0, window_bounds = array<i64: 8, 128>}, {transform_indices = @transform_1, window_bounds = array<i64: 128, 128>}, {transform_indices = @transform_2, window_bounds = array<i64: 1, 128>}, {transform_indices = @transform_3, window_bounds = array<i64: 128, 256>}, {pipeline_mode = #tpu.pipeline_mode<synchronous>, transform_indices = @transform_4, window_bounds = array<i64: 1, 256>}, {pipeline_mode = #tpu.pipeline_mode<synchronous>, transform_indices = @transform_5, window_bounds = array<i64: 256, 128>}, {pipeline_mode = #tpu.pipeline_mode<synchronous>, transform_indices = @transform_6, window_bounds = array<i64: 1, 128>}, {pipeline_mode = #tpu.pipeline_mode<synchronous>, transform_indices = @transform_7, window_bounds = array<i64: 8, 128>}]} {
    %c0_i32 = arith.constant 0 : i32
    %0 = arith.cmpi eq, %arg0, %c0_i32 : i32
    %1 = arith.extui %0 : i1 to i32
    %c0_i32_0 = arith.constant 0 : i32
    %2 = arith.cmpi ne, %1, %c0_i32_0 : i32
    scf.if %2 {
      %cst_15 = arith.constant 0.000000e+00 : f32
      %21 = vector.broadcast %cst_15 : f32 to vector<8x256xf32>
      %c0_16 = arith.constant 0 : index
      %c0_17 = arith.constant 0 : index
      %22 = vector.load %arg9[%c0_16, %c0_17] : memref<8x256xf32, #tpu.memory_space<vmem>>, vector<8x256xf32>
      tpu.vector_store %arg9[%c0_16, %c0_17], %21 {strides = array<i32>} : memref<8x256xf32, #tpu.memory_space<vmem>>, vector<8x256xf32>,
    } else {
    }
    %c0 = arith.constant 0 : index
    %c0_1 = arith.constant 0 : index
    %3 = vector.load %arg1[%c0, %c0_1] : memref<8x128xf32, #tpu.memory_space<vmem>>, vector<8x128xf32>
    %4 = arith.truncf %3 : vector<8x128xf32> to vector<8x128xbf16>
    %c0_2 = arith.constant 0 : index
    %c0_3 = arith.constant 0 : index
    %5 = vector.load %arg2[%c0_2, %c0_3] : memref<128x128xbf16, #tpu.memory_space<vmem>>, vector<128x128xbf16>
    %cst = arith.constant dense<0.000000e+00> : vector<8x128xf32>
    %6 = tpu.matmul %4, %5, %cst {dimension_numbers = #tpu.dot_dimension_numbers<[1], [0], [0], [1], [0, 0, 1, 1], [], []>} : vector<8x128xbf16>, vector<128x128xbf16>, vector<8x128xf32> -> vector<8x128xf32>
    %c0_4 = arith.constant 0 : index
    %c0_5 = arith.constant 0 : index
    %7 = vector.load %arg3[%c0_4, %c0_5] : memref<1x128xf32, #tpu.memory_space<vmem>>, vector<1x128xf32>
    %8 = vector.broadcast %7 : vector<1x128xf32> to vector<8x128xf32>
    %9 = arith.addf %6, %8 : vector<8x128xf32>
    %cst_6 = arith.constant 0.000000e+00 : f32
    %10 = vector.broadcast %cst_6 : f32 to vector<8x128xf32>
    %11 = arith.maximumf %9, %10 : vector<8x128xf32>
    %c0_7 = arith.constant 0 : index
    %c0_8 = arith.constant 0 : index
    %12 = vector.load %arg9[%c0_7, %c0_8] : memref<8x256xf32, #tpu.memory_space<vmem>>, vector<8x256xf32>
    %13 = arith.truncf %11 : vector<8x128xf32> to vector<8x128xbf16>
    %c0_9 = arith.constant 0 : index
    %c0_10 = arith.constant 0 : index
    %14 = vector.load %arg4[%c0_9, %c0_10] : memref<128x256xbf16, #tpu.memory_space<vmem>>, vector<128x256xbf16>
    %cst_11 = arith.constant dense<0.000000e+00> : vector<8x256xf32>
    %15 = tpu.matmul %13, %14, %cst_11 {dimension_numbers = #tpu.dot_dimension_numbers<[1], [0], [0], [1], [0, 0, 1, 1], [], []>} : vector<8x128xbf16>, vector<128x256xbf16>, vector<8x256xf32> -> vector<8x256xf32>
    %16 = arith.addf %12, %15 : vector<8x256xf32>
    %c0_12 = arith.constant 0 : index
    %c0_13 = arith.constant 0 : index
    %17 = vector.load %arg9[%c0_12, %c0_13] : memref<8x256xf32, #tpu.memory_space<vmem>>, vector<8x256xf32>
    tpu.vector_store %arg9[%c0_12, %c0_13], %16 {strides = array<i32>} : memref<8x256xf32, #tpu.memory_space<vmem>>, vector<8x256xf32>,
    %c1_i32 = arith.constant 1 : i32
    %18 = arith.cmpi eq, %arg0, %c1_i32 : i32
    %19 = arith.extui %18 : i1 to i32
    %c0_i32_14 = arith.constant 0 : i32
    %20 = arith.cmpi ne, %19, %c0_i32_14 : i32
    scf.if %20 {
      %c0_15 = arith.constant 0 : index
      %c0_16 = arith.constant 0 : index
      %21 = vector.load %arg9[%c0_15, %c0_16] : memref<8x256xf32, #tpu.memory_space<vmem>>, vector<8x256xf32>
      %c0_17 = arith.constant 0 : index
      %c0_18 = arith.constant 0 : index
      %22 = vector.load %arg5[%c0_17, %c0_18] : memref<1x256xf32, #tpu.memory_space<vmem>>, vector<1x256xf32>
      %23 = vector.broadcast %22 : vector<1x256xf32> to vector<8x256xf32>
      %24 = arith.addf %21, %23 : vector<8x256xf32>
      %cst_19 = arith.constant 0.000000e+00 : f32
      %25 = vector.broadcast %cst_19 : f32 to vector<8x256xf32>
      %26 = arith.maximumf %24, %25 : vector<8x256xf32>
      %27 = arith.truncf %26 : vector<8x256xf32> to vector<8x256xbf16>
      %c0_20 = arith.constant 0 : index
      %c0_21 = arith.constant 0 : index
      %28 = vector.load %arg6[%c0_20, %c0_21] : memref<256x128xbf16, #tpu.memory_space<vmem>>, vector<256x128xbf16>
      %cst_22 = arith.constant dense<0.000000e+00> : vector<8x128xf32>
      %29 = tpu.matmul %27, %28, %cst_22 {dimension_numbers = #tpu.dot_dimension_numbers<[1], [0], [0], [1], [0, 0, 1, 1], [], []>} : vector<8x256xbf16>, vector<256x128xbf16>, vector<8x128xf32> -> vector<8x128xf32>
      %c0_23 = arith.constant 0 : index
      %c0_24 = arith.constant 0 : index
      %30 = vector.load %arg7[%c0_23, %c0_24] : memref<1x128xf32, #tpu.memory_space<vmem>>, vector<1x128xf32>
      %31 = vector.broadcast %30 : vector<1x128xf32> to vector<8x128xf32>
      %32 = arith.addf %29, %31 : vector<8x128xf32>
      %c0_25 = arith.constant 0 : index
      %c0_26 = arith.constant 0 : index
      %33 = vector.load %arg8[%c0_25, %c0_26] : memref<8x128xf32, #tpu.memory_space<vmem>>, vector<8x128xf32>
      tpu.vector_store %arg8[%c0_25, %c0_26], %32 {strides = array<i32>} : memref<8x128xf32, #tpu.memory_space<vmem>>, vector<8x128xf32>,
    } else {
    }
    return
  }
  func.func @transform_0(%arg0: i32) -> (i32, i32) {
    %c0_i32 = arith.constant 0 : i32
    %c0_i32_0 = arith.constant 0 : i32
    %c0_i32_1 = arith.constant 0 : i32
    return %c0_i32, %c0_i32_0 : i32, i32
  }
  func.func @transform_1(%arg0: i32) -> (i32, i32) {
    %c0_i32 = arith.constant 0 : i32
    %c0_i32_0 = arith.constant 0 : i32
    return %c0_i32, %arg0 : i32, i32
  }
  func.func @transform_2(%arg0: i32) -> (i32, i32) {
    %c0_i32 = arith.constant 0 : i32
    %c0_i32_0 = arith.constant 0 : i32
    return %c0_i32, %arg0 : i32, i32
  }
  func.func @transform_3(%arg0: i32) -> (i32, i32) {
    %c0_i32 = arith.constant 0 : i32
    %c0_i32_0 = arith.constant 0 : i32
    return %arg0, %c0_i32 : i32, i32
  }
  func.func @transform_4(%arg0: i32) -> (i32, i32) {
    %c0_i32 = arith.constant 0 : i32
    %c0_i32_0 = arith.constant 0 : i32
    %c0_i32_1 = arith.constant 0 : i32
    return %c0_i32, %c0_i32_0 : i32, i32
  }
  func.func @transform_5(%arg0: i32) -> (i32, i32) {
    %c0_i32 = arith.constant 0 : i32
    %c0_i32_0 = arith.constant 0 : i32
    %c0_i32_1 = arith.constant 0 : i32
    return %c0_i32, %c0_i32_0 : i32, i32
  }
  func.func @transform_6(%arg0: i32) -> (i32, i32) {
    %c0_i32 = arith.constant 0 : i32
    %c0_i32_0 = arith.constant 0 : i32
    %c0_i32_1 = arith.constant 0 : i32
    return %c0_i32, %c0_i32_0 : i32, i32
  }
  func.func @transform_7(%arg0: i32) -> (i32, i32) {
    %c0_i32 = arith.constant 0 : i32
    %c0_i32_0 = arith.constant 0 : i32
    %c0_i32_1 = arith.constant 0 : i32
    return %c0_i32, %c0_i32_0 : i32, i32
  }
}

</mosaic_0001>

<llo_original>
// kernel: tpu_custom_call.1
$region0: #{tpu_custom_call.1}
  #allocation0 [shape = 'u32[]', space=smem, size = 0x4, offset = 0x4, fixed_abs, tag = 'smem constant byte address 0x4 - core index']
  #allocation1 [shape = 'u32[144,128]{1,0:T(1,128)}', space=vmem, size = 0x12000, scoped, tag = 'internal scratch']
  #allocation2 [shape = 'f32[8,256]{1,0:T(8,128)}', space=vmem, size = 0x2000, scoped, tag = 'scratch operand']
  %s0 = inlined_call_operand.hbm [shape: f32[8,128], index: 0, kind: input, shape index: {}]
  %s1 = inlined_call_operand.hbm [shape: bf16[128,256], index: 1, kind: input, shape index: {}]
  %s2 = inlined_call_operand.vmem [shape: f32[1,256], index: 2, kind: input, shape index: {}]
  %s3 = inlined_call_operand.hbm [shape: bf16[256,256], index: 3, kind: input, shape index: {}]
  %s4 = inlined_call_operand.vmem [shape: f32[1,256], index: 4, kind: input, shape index: {}]
  %s5 = inlined_call_operand.hbm [shape: bf16[256,128], index: 5, kind: input, shape index: {}]
  %s6 = inlined_call_operand.vmem [shape: f32[1,128], index: 6, kind: input, shape index: {}]
  %s7 = inlined_call_operand.hbm [shape: f32[8,128], index: 7, kind: output, shape index: {}]
  %s8 = sld [smem:[#allocation0]]
  $region85: #{tpu_custom_call.1} parent=0
    _
  %s10 = ssub.s32 1, %s8
  %s11 = scalar_select 0, %s10, %s8
  $region1: #{tpu_custom_call.1} parent=0
    #allocation3 [shape = 'u8[4096]{0}', space=vmem, size = 0x1000, scoped, tag = 'input window, operand 0, single buffered']
    #allocation4 [shape = 's32[2]{0}', space=sflag, size = 0x8, scoped, tag = 'scoped memory for tpu_custom_call.1']
    #allocation5 [shape = 's32[2]{0}', space=sflag, size = 0x8, scoped, tag = 'scoped memory for tpu_custom_call.1']
    #allocation6 [shape = 'u8[65536]{0}', space=vmem, size = 0x10000, scoped, tag = 'input window, operand 1']
    #allocation7 [shape = 's32[2]{0}', space=sflag, size = 0x8, scoped, tag = 'scoped memory for tpu_custom_call.1']
    #allocation8 [shape = 'u8[131072]{0}', space=vmem, size = 0x20000, scoped, tag = 'input window, operand 3']
    #allocation9 [shape = 'u8[65536]{0}', space=vmem, size = 0x10000, scoped, tag = 'input window, operand 5, single buffered']
    #allocation10 [shape = 's32[1]{0}', space=sflag, size = 0x4, scoped, tag = 'scoped memory for tpu_custom_call.1']
    #allocation11 [shape = 'u8[4096]{0}', space=vmem, size = 0x1000, scoped, tag = 'output window, operand 0, single buffered']
    %12 = vsyncpa [#allocation4], 0
    %13 = vsyncpa [#allocation7], 0
    %s14 = scalar_lea.sflag [#allocation7], 1
    %15 = vsyncpa %s14, 0
    %16 = vsyncpa [#allocation10], 0
    %17 = vsyncpa [#allocation5], 0
    loop: start=0, step=1, limit=4
    $region2: #{tpu_custom_call.1} parent=1 // loop_pre_header
      _
    $region3: #{tpu_custom_call.1} parent=1 // loop_header
      %s19 = sphi 0, %s23
      %p20 = scmp.ge.s32.totalorder %s19, 4
      %s27 = sphi 0, %s27
      %s29 = sphi 0, %s27
      %s30 = sphi 0, %s29
      %s44 = sphi 0, %s30
      %s50 = sphi 0, %s52
      %s53 = sphi 0, %s50
      %s54 = sphi 0, %s53
      %s70 = sphi 0, %s54
      %s76 = sphi 0, %s78
      %s79 = sphi 0, %s76
      %s80 = sphi 0, %s79
      %s96 = sphi 0, %s80
      %s102 = sphi 0, %s104
      %s105 = sphi 0, %s102
      %s106 = sphi 0, %s105
      %s122 = sphi 0, %s106
      %s126 = sphi 0, %s126
      %s128 = sphi 0, %s126
      %s129 = sphi 0, %s128
      %s143 = sphi 0, %s129
      %s147 = sphi 0, %s147
      %s149 = sphi 0, %s147
      %s150 = sphi 0, %s149
      %s164 = sphi 0, %s150
      %s168 = sphi 0, %s168
      %s170 = sphi 0, %s168
      %s171 = sphi 0, %s170
      %s185 = sphi 0, %s171
      %s189 = sphi 0, %s189
      %s191 = sphi 0, %s189
      %s192 = sphi 0, %s191
      %s206 = sphi 0, %s192
    $region4: #{tpu_custom_call.1} parent=1 // loop_header_branch
      %22 = sbr.rel (%p20) target = $region8
    $region5: #{tpu_custom_call.1} parent=1 // loop_body
      %s24 = ssub.s32 %s19, 1
      %s25 = ssub.s32 %s19, 2
      %s26 = sadd.s32 %s19, 1
      %s28 = sadd.s32 %s27, 1
      %p31 = scmp.eq.s32.totalorder %s19, 1
      %p32 = scmp.ne.s32.totalorder %s27, %s29
      %p33 = scmp.eq.s32.totalorder %s19, 0
      %p34 = por %p32, %p33
      %p35 = scmp.ne.s32.totalorder %s27, %s29
      %p36 = scmp.eq.s32.totalorder %s24, 1
      %p37 = por %p35, %p36
      %p38 = scmp.ne.s32.totalorder %s29, %s30
      %p39 = scmp.eq.s32.totalorder %s24, 0
      %p40 = por %p38, %p39
      %p41 = scmp.ne.s32.totalorder %s29, %s30
      %p42 = scmp.eq.s32.totalorder %s25, 1
      %p43 = por %p41, %p42
      %p45 = scmp.ne.s32.totalorder %s30, %s44
      %p46 = scmp.eq.s32.totalorder %s25, 0
      %p47 = por %p45, %p46
      %s48 = ssub.s32 %s19, %s26
      %p49 = scmp.eq.s32.totalorder %s48, 0
      %s51 = sadd.s32 %s50, 1
      %s52 = scalar_select %p49, %s50, %s51
      %p55 = pneg %p49
      %p56 = scmp.eq.s32.totalorder %s19, 1
      %p57 = por %p55, %p56
      %p58 = scmp.ne.s32.totalorder %s50, %s53
      %p59 = scmp.eq.s32.totalorder %s19, 0
      %p60 = por %p58, %p59
      %p61 = scmp.ne.s32.totalorder %s50, %s53
      %p62 = scmp.eq.s32.totalorder %s24, 1
      %p63 = por %p61, %p62
      %p64 = scmp.ne.s32.totalorder %s53, %s54
      %p65 = scmp.eq.s32.totalorder %s24, 0
      %p66 = por %p64, %p65
      %p67 = scmp.ne.s32.totalorder %s53, %s54
      %p68 = scmp.eq.s32.totalorder %s25, 1
      %p69 = por %p67, %p68
      %p71 = scmp.ne.s32.totalorder %s54, %s70
      %p72 = scmp.eq.s32.totalorder %s25, 0
      %p73 = por %p71, %p72
      %s74 = ssub.s32 %s19, %s26
      %p75 = scmp.eq.s32.totalorder %s74, 0
      %s77 = sadd.s32 %s76, 1
      %s78 = scalar_select %p75, %s76, %s77
      %p81 = pneg %p75
      %p82 = scmp.eq.s32.totalorder %s19, 1
      %p83 = por %p81, %p82
      %p84 = scmp.ne.s32.totalorder %s76, %s79
      %p85 = scmp.eq.s32.totalorder %s19, 0
      %p86 = por %p84, %p85
      %p87 = scmp.ne.s32.totalorder %s76, %s79
      %p88 = scmp.eq.s32.totalorder %s24, 1
      %p89 = por %p87, %p88
      %p90 = scmp.ne.s32.totalorder %s79, %s80
      %p91 = scmp.eq.s32.totalorder %s24, 0
      %p92 = por %p90, %p91
      %p93 = scmp.ne.s32.totalorder %s79, %s80
      %p94 = scmp.eq.s32.totalorder %s25, 1
      %p95 = por %p93, %p94
      %p97 = scmp.ne.s32.totalorder %s80, %s96
      %p98 = scmp.eq.s32.totalorder %s25, 0
      %p99 = por %p97, %p98
      %s100 = ssub.s32 %s19, %s26
      %p101 = scmp.eq.s32.totalorder %s100, 0
      %s103 = sadd.s32 %s102, 1
      %s104 = scalar_select %p101, %s102, %s103
      %p107 = pneg %p101
      %p108 = scmp.eq.s32.totalorder %s19, 1
      %p109 = por %p107, %p108
      %p110 = scmp.ne.s32.totalorder %s102, %s105
      %p111 = scmp.eq.s32.totalorder %s19, 0
      %p112 = por %p110, %p111
      %p113 = scmp.ne.s32.totalorder %s102, %s105
      %p114 = scmp.eq.s32.totalorder %s24, 1
      %p115 = por %p113, %p114
      %p116 = scmp.ne.s32.totalorder %s105, %s106
      %p117 = scmp.eq.s32.totalorder %s24, 0
      %p118 = por %p116, %p117
      %p119 = scmp.ne.s32.totalorder %s105, %s106
      %p120 = scmp.eq.s32.totalorder %s25, 1
      %p121 = por %p119, %p120
      %p123 = scmp.ne.s32.totalorder %s106, %s122
      %p124 = scmp.eq.s32.totalorder %s25, 0
      %p125 = por %p123, %p124
      %s127 = sadd.s32 %s126, 1
      %p130 = scmp.eq.s32.totalorder %s19, 1
      %p131 = scmp.ne.s32.totalorder %s126, %s128
      %p132 = scmp.eq.s32.totalorder %s19, 0
      %p133 = por %p131, %p132
      %p134 = scmp.ne.s32.totalorder %s126, %s128
      %p135 = scmp.eq.s32.totalorder %s24, 1
      %p136 = por %p134, %p135
      %p137 = scmp.ne.s32.totalorder %s128, %s129
      %p138 = scmp.eq.s32.totalorder %s24, 0
      %p139 = por %p137, %p138
      %p140 = scmp.ne.s32.totalorder %s128, %s129
      %p141 = scmp.eq.s32.totalorder %s25, 1
      %p142 = por %p140, %p141
      %p144 = scmp.ne.s32.totalorder %s129, %s143
      %p145 = scmp.eq.s32.totalorder %s25, 0
      %p146 = por %p144, %p145
      %s148 = sadd.s32 %s147, 1
      %p151 = scmp.eq.s32.totalorder %s19, 1
      %p152 = scmp.ne.s32.totalorder %s147, %s149
      %p153 = scmp.eq.s32.totalorder %s19, 0
      %p154 = por %p152, %p153
      %p155 = scmp.ne.s32.totalorder %s147, %s149
      %p156 = scmp.eq.s32.totalorder %s24, 1
      %p157 = por %p155, %p156
      %p158 = scmp.ne.s32.totalorder %s149, %s150
      %p159 = scmp.eq.s32.totalorder %s24, 0
      %p160 = por %p158, %p159
      %p161 = scmp.ne.s32.totalorder %s149, %s150
      %p162 = scmp.eq.s32.totalorder %s25, 1
      %p163 = por %p161, %p162
      %p165 = scmp.ne.s32.totalorder %s150, %s164
      %p166 = scmp.eq.s32.totalorder %s25, 0
      %p167 = por %p165, %p166
      %s169 = sadd.s32 %s168, 1
      %p172 = scmp.eq.s32.totalorder %s19, 1
      %p173 = scmp.ne.s32.totalorder %s168, %s170
      %p174 = scmp.eq.s32.totalorder %s19, 0
      %p175 = por %p173, %p174
      %p176 = scmp.ne.s32.totalorder %s168, %s170
      %p177 = scmp.eq.s32.totalorder %s24, 1
      %p178 = por %p176, %p177
      %p179 = scmp.ne.s32.totalorder %s170, %s171
      %p180 = scmp.eq.s32.totalorder %s24, 0
      %p181 = por %p179, %p180
      %p182 = scmp.ne.s32.totalorder %s170, %s171
      %p183 = scmp.eq.s32.totalorder %s25, 1
      %p184 = por %p182, %p183
      %p186 = scmp.ne.s32.totalorder %s171, %s185
      %p187 = scmp.eq.s32.totalorder %s25, 0
      %p188 = por %p186, %p187
      %s190 = sadd.s32 %s189, 1
      %p193 = scmp.eq.s32.totalorder %s19, 1
      %p194 = scmp.ne.s32.totalorder %s189, %s191
      %p195 = scmp.eq.s32.totalorder %s19, 0
      %p196 = por %p194, %p195
      %p197 = scmp.ne.s32.totalorder %s189, %s191
      %p198 = scmp.eq.s32.totalorder %s24, 1
      %p199 = por %p197, %p198
      %p200 = scmp.ne.s32.totalorder %s191, %s192
      %p201 = scmp.eq.s32.totalorder %s24, 0
      %p202 = por %p200, %p201
      %p203 = scmp.ne.s32.totalorder %s191, %s192
      %p204 = scmp.eq.s32.totalorder %s25, 1
      %p205 = por %p203, %p204
      %p207 = scmp.ne.s32.totalorder %s192, %s206
      %p208 = scmp.eq.s32.totalorder %s25, 0
      %p209 = por %p207, %p208
      %p210 = scmp.le.s32.totalorder 1, %s19
      %p211 = scmp.lt.s32.totalorder %s19, 3
      %p212 = pnand %p210, %p211
      %p213 = pneg %p212
      // Predicated region
      $region9: #{tpu_custom_call.1} parent=5 // pred_check
        _
      $region10: #{tpu_custom_call.1} parent=5 // pred_check_branch
        %215 = sbr.rel (%p212) target = $region12
      $region11: #{tpu_custom_call.1} parent=5 // pred_region
        %s216 = ssub.s32 %s19, 1
        // Predicated region
        $region13: #{tpu_custom_call.1} parent=11 // pred_check
          %p217 = pneg %p40
        $region14: #{tpu_custom_call.1} parent=11 // pred_check_branch
          %219 = sbr.rel (%p217) target = $region16
        $region15: #{tpu_custom_call.1} parent=11 // pred_region
          %s221 = ssub.s32 128, 128
          %222 = vsyncadd [#allocation4], %s221
          %s224 = sshll.u32 [#allocation3], 4
          %s225 = int_to_ptr.vmem [resolvable:$true] %s224
          %227 = dma.hbm_to_vmem [thread:$0]  %s0, 128, %s225, [#allocation4]
        $region16: #{tpu_custom_call.1} parent=11 // pred_fallthru
          _
        // Predicated region
        $region17: #{tpu_custom_call.1} parent=11 // pred_check
          %p228 = pneg %p139
        $region18: #{tpu_custom_call.1} parent=11 // pred_check_branch
          %230 = sbr.rel (%p228) target = $region20
        $region19: #{tpu_custom_call.1} parent=11 // pred_region
          _
        $region20: #{tpu_custom_call.1} parent=11 // pred_fallthru
          _
        // Predicated region
        $region21: #{tpu_custom_call.1} parent=11 // pred_check
          %p231 = pneg %p160
        $region22: #{tpu_custom_call.1} parent=11 // pred_check_branch
          %233 = sbr.rel (%p231) target = $region24
        $region23: #{tpu_custom_call.1} parent=11 // pred_region
          %s235 = ssub.s32 2048, 2048
          %236 = vsyncadd [#allocation10], %s235
          %s237 = sshll.u32 [#allocation9], 4
          %s238 = int_to_ptr.vmem [resolvable:$true] %s237
          %243 = dma.hbm_to_vmem [thread:$0]  %s5, 2048, %s238, [#allocation10], 64, 64, 4
        $region24: #{tpu_custom_call.1} parent=11 // pred_fallthru
          _
        // Predicated region
        $region25: #{tpu_custom_call.1} parent=11 // pred_check
          %p244 = pneg %p181
        $region26: #{tpu_custom_call.1} parent=11 // pred_check_branch
          %246 = sbr.rel (%p244) target = $region28
        $region27: #{tpu_custom_call.1} parent=11 // pred_region
          _
        $region28: #{tpu_custom_call.1} parent=11 // pred_fallthru
          _
      $region12: #{tpu_custom_call.1} parent=5 // pred_fallthru
        _
      %p247 = scmp.lt.s32.totalorder %s19, 2
      // Predicated region
      $region29: #{tpu_custom_call.1} parent=5 // pred_check
        %p248 = pneg %p247
      $region30: #{tpu_custom_call.1} parent=5 // pred_check_branch
        %250 = sbr.rel (%p248) target = $region32
      $region31: #{tpu_custom_call.1} parent=5 // pred_region
        // Predicated region
        $region33: #{tpu_custom_call.1} parent=31 // pred_check
          %p251 = pneg %p60
        $region34: #{tpu_custom_call.1} parent=31 // pred_check_branch
          %253 = sbr.rel (%p251) target = $region36
        $region35: #{tpu_custom_call.1} parent=31 // pred_region
          %s254 = sand.u32 %s19, 1
          %s255 = scalar_lea.sflag [#allocation7], %s254
          %s256 = sand.u32 %s50, 1
          %s257 = smul.addr %s256, 64
          %s258 = scalar_lea.vmem [#allocation6], %s257
          %s260 = ssub.s32 1024, 1024
          %261 = vsyncadd %s255, %s260
          %s262 = smul.addr %s19, 64
          %s263 = scalar_lea.hbm %s1, %s262
          %s264 = sshll.u32 %s258, 4
          %s265 = int_to_ptr.vmem [resolvable:$true] %s264
          %270 = dma.hbm_to_vmem [thread:$0]  %s263, 1024, %s265, %s255, 128, 64, 4
        $region36: #{tpu_custom_call.1} parent=31 // pred_fallthru
          _
        // Predicated region
        $region37: #{tpu_custom_call.1} parent=31 // pred_check
          %p271 = pneg %p86
        $region38: #{tpu_custom_call.1} parent=31 // pred_check_branch
          %273 = sbr.rel (%p271) target = $region40
        $region39: #{tpu_custom_call.1} parent=31 // pred_region
          %p274 = scmp.lt.s32.totalorder %s19, 1
          %s275 = scalar_select %p274, %s19, 1
          %s276 = scalar_lea.vmem %s2, %s275
        $region40: #{tpu_custom_call.1} parent=31 // pred_fallthru
          _
        // Predicated region
        $region41: #{tpu_custom_call.1} parent=31 // pred_check
          %p277 = pneg %p112
        $region42: #{tpu_custom_call.1} parent=31 // pred_check_branch
          %279 = sbr.rel (%p277) target = $region44
        $region43: #{tpu_custom_call.1} parent=31 // pred_region
          %s280 = sand.u32 %s19, 1
          %s281 = scalar_lea.sflag [#allocation7], %s280
          %s282 = sand.u32 %s102, 1
          %s283 = smul.addr %s282, 128
          %s284 = scalar_lea.vmem [#allocation8], %s283
          %s285 = smul.u32 16, %s19
          %s287 = ssub.s32 2048, 2048
          %288 = vsyncadd %s281, %s287
          %s289 = smul.addr %s285, 2
          %s290 = smul.addr %s289, 64
          %s291 = scalar_lea.hbm %s3, %s290
          %s292 = sshll.u32 %s284, 4
          %s293 = int_to_ptr.vmem [resolvable:$true] %s292
          %298 = dma.hbm_to_vmem [thread:$0]  %s291, 2048, %s293, %s281, 128, 128, 8
        $region44: #{tpu_custom_call.1} parent=31 // pred_fallthru
          _
      $region32: #{tpu_custom_call.1} parent=5 // pred_fallthru
        _
      %p299 = scmp.le.s32.totalorder 1, %s19
      %p300 = scmp.lt.s32.totalorder %s19, 3
      %p301 = pnand %p299, %p300
      %p302 = pneg %p301
      // Predicated region
      $region45: #{tpu_custom_call.1} parent=5 // pred_check
        _
      $region46: #{tpu_custom_call.1} parent=5 // pred_check_branch
        %304 = sbr.rel (%p301) target = $region48
      $region47: #{tpu_custom_call.1} parent=5 // pred_region
        %s305 = ssub.s32 %s19, 1
        // Predicated region
        $region49: #{tpu_custom_call.1} parent=47 // pred_check
          %p306 = pneg %p40
        $region50: #{tpu_custom_call.1} parent=47 // pred_check_branch
          %308 = sbr.rel (%p306) target = $region52
        $region51: #{tpu_custom_call.1} parent=47 // pred_region
          %309 = dma.done [#allocation4], 128
        $region52: #{tpu_custom_call.1} parent=47 // pred_fallthru
          _
        %s310 = sand.u32 %s24, 1
        %s311 = scalar_lea.sflag [#allocation7], %s310
        %s312 = sand.u32 %s53, 1
        %s313 = smul.addr %s312, 64
        %s314 = scalar_lea.vmem [#allocation6], %s313
        // Predicated region
        $region53: #{tpu_custom_call.1} parent=47 // pred_check
          %p315 = pneg %p66
        $region54: #{tpu_custom_call.1} parent=47 // pred_check_branch
          %317 = sbr.rel (%p315) target = $region56
        $region55: #{tpu_custom_call.1} parent=47 // pred_region
          %318 = dma.done %s311, 1024
        $region56: #{tpu_custom_call.1} parent=47 // pred_fallthru
          _
        %s319 = sand.u32 %s24, 1
        %s320 = scalar_lea.sflag [#allocation7], %s319
        %s321 = sand.u32 %s105, 1
        %s322 = smul.addr %s321, 128
        %s323 = scalar_lea.vmem [#allocation8], %s322
        // Predicated region
        $region57: #{tpu_custom_call.1} parent=47 // pred_check
          %p324 = pneg %p118
        $region58: #{tpu_custom_call.1} parent=47 // pred_check_branch
          %326 = sbr.rel (%p324) target = $region60
        $region59: #{tpu_custom_call.1} parent=47 // pred_region
          %327 = dma.done %s320, 2048
        $region60: #{tpu_custom_call.1} parent=47 // pred_fallthru
          _
        // Predicated region
        $region61: #{tpu_custom_call.1} parent=47 // pred_check
          %p328 = pneg %p160
        $region62: #{tpu_custom_call.1} parent=47 // pred_check_branch
          %330 = sbr.rel (%p328) target = $region64
        $region63: #{tpu_custom_call.1} parent=47 // pred_region
          %331 = dma.done [#allocation10], 2048
        $region64: #{tpu_custom_call.1} parent=47 // pred_fallthru
          _
        %p332 = pneg %p40
        %p333 = pneg %p37
        %s334 = sand.u32 %s24, 1
        %s335 = scalar_lea.sflag [#allocation7], %s334
        %s336 = sand.u32 %s53, 1
        %s337 = smul.addr %s336, 64
        %s338 = scalar_lea.vmem [#allocation6], %s337
        %p339 = pneg %p66
        %p340 = pneg %p63
        %p341 = scmp.lt.s32.totalorder %s24, 1
        %s342 = scalar_select %p341, %s24, 1
        %s343 = scalar_lea.vmem %s2, %s342
        %p344 = pneg %p92
        %p345 = pneg %p89
        %s346 = sand.u32 %s24, 1
        %s347 = scalar_lea.sflag [#allocation7], %s346
        %s348 = sand.u32 %s105, 1
        %s349 = smul.addr %s348, 128
        %s350 = scalar_lea.vmem [#allocation8], %s349
        %p351 = pneg %p118
        %p352 = pneg %p115
        %p353 = pneg %p139
        %p354 = pneg %p136
        %p355 = pneg %p160
        %p356 = pneg %p157
        %p357 = pneg %p181
        %p358 = pneg %p178
        %p359 = pneg %p202
        %p360 = pneg %p199
        %p361 = scmp.lt.s32.totalorder %s24, 1
        %s362 = scalar_select %p361, %s24, 1
        %s363 = scalar_lea.vmem %s2, %s362
        %s364 = smul.u32 16, %s24
        %p366 = scmp.eq.s32.totalorder %s24, 0
        // Predicated region
        $region65: #{tpu_custom_call.1} parent=47 // pred_check
          %p367 = pneg %p366
        $region66: #{tpu_custom_call.1} parent=47 // pred_check_branch
          %369 = sbr.rel (%p367) target = $region68
        $region67: #{tpu_custom_call.1} parent=47 // pred_region
          %370 = vst [vmem:[#allocation2] sm:$0xff] 0.0
          %371 = vst [vmem:[#allocation2 + $0x8] sm:$0xff] 0.0
        $region68: #{tpu_custom_call.1} parent=47 // pred_fallthru
          _
        %v372 = vld [vmem:[#allocation3] sm:$0xff]
        %v373 = vpack.c.bf16 %v372, %v372
        %v374 = vld [vmem:[%s314] sm:$0xf]
        %v375 = vld [vmem:[%s314 + $0x4] sm:$0xf]
        %v376 = vld [vmem:[%s314 + $0x8] sm:$0xf]
        %v377 = vld [vmem:[%s314 + $0xc] sm:$0xf]
        %v378 = vld [vmem:[%s314 + $0x10] sm:$0xf]
        %v379 = vld [vmem:[%s314 + $0x14] sm:$0xf]
        %v380 = vld [vmem:[%s314 + $0x18] sm:$0xf]
        %v381 = vld [vmem:[%s314 + $0x1c] sm:$0xf]
        %v382 = vld [vmem:[%s314 + $0x20] sm:$0xf]
        %v383 = vld [vmem:[%s314 + $0x24] sm:$0xf]
        %v384 = vld [vmem:[%s314 + $0x28] sm:$0xf]
        %v385 = vld [vmem:[%s314 + $0x2c] sm:$0xf]
        %v386 = vld [vmem:[%s314 + $0x30] sm:$0xf]
        %v387 = vld [vmem:[%s314 + $0x34] sm:$0xf]
        %v388 = vld [vmem:[%s314 + $0x38] sm:$0xf]
        %v389 = vld [vmem:[%s314 + $0x3c] sm:$0xf]
        %v390 = vld [vmem:[%s363] sm:$0x1]
        %v392 = vlaneseq
        %v393 = vshrl.u32 %v392, 7
        %v394 = vsub.s32 0, %v393
        %v395 = vrot.slane %v390, %v394
        %v413 = vunpack.c.l.b16 %v374
        %v414 = vunpack.c.l.b16 %v375
        %v415 = vunpack.c.l.b16 %v376
        %v416 = vunpack.c.l.b16 %v377
        %v417 = vunpack.c.l.b16 %v378
        %v418 = vunpack.c.l.b16 %v379
        %v419 = vunpack.c.l.b16 %v380
        %v420 = vunpack.c.l.b16 %v381
        %v421 = vunpack.c.l.b16 %v382
        %v422 = vunpack.c.l.b16 %v383
        %v423 = vunpack.c.l.b16 %v384
        %v424 = vunpack.c.l.b16 %v385
        %v425 = vunpack.c.l.b16 %v386
        %v426 = vunpack.c.l.b16 %v387
        %v427 = vunpack.c.l.b16 %v388
        %v428 = vunpack.c.l.b16 %v389
        %v429 = vpack.c.b16 %v414, %v413
        %v430 = vpack.c.b16 %v416, %v415
        %v431 = vpack.c.b16 %v418, %v417
        %v432 = vpack.c.b16 %v420, %v419
        %v433 = vpack.c.b16 %v422, %v421
        %v434 = vpack.c.b16 %v424, %v423
        %v435 = vpack.c.b16 %v426, %v425
        %v436 = vpack.c.b16 %v428, %v427
        %445 = vmatprep.subr.bf16.mxu0 0
        %446 = vmatpush1.bf16.msra.mxu0 %v436
        %447 = vmatprep.subr.bf16.mxu0 0
        %448 = vmatpush1.bf16.msra.mxu0 %v435
        %449 = vmatprep.subr.bf16.mxu0 0
        %450 = vmatpush1.bf16.msra.mxu0 %v434
        %451 = vmatprep.subr.bf16.mxu0 0
        %452 = vmatpush1.bf16.msra.mxu0 %v433
        %453 = vmatprep.subr.bf16.mxu0 0
        %454 = vmatpush1.bf16.msra.mxu0 %v432
        %455 = vmatprep.subr.bf16.mxu0 0
        %456 = vmatpush1.bf16.msra.mxu0 %v431
        %457 = vmatprep.subr.bf16.mxu0 0
        %458 = vmatpush1.bf16.msra.mxu0 %v430
        %459 = vmatprep.subr.bf16.mxu0 0
        %460 = vmatpush1.bf16.msra.mxu0 %v429
        %461 = vmatprep.subr.bf16.mxu0 0
        %462 = vmatpush2.bf16.msra.mxu0 0
        %463 = vmatprep.subr.bf16.mxu0 0
        %464 = vmatpush2.bf16.msra.mxu0 0
        %465 = vmatprep.subr.bf16.mxu0 0
        %466 = vmatpush2.bf16.msra.mxu0 0
        %467 = vmatprep.subr.bf16.mxu0 0
        %468 = vmatpush2.bf16.msra.mxu0 0
        %469 = vmatprep.subr.bf16.mxu0 0
        %470 = vmatpush2.bf16.msra.mxu0 0
        %471 = vmatprep.subr.bf16.mxu0 0
        %472 = vmatpush2.bf16.msra.mxu0 0
        %473 = vmatprep.subr.bf16.mxu0 0
        %474 = vmatpush2.bf16.msra.mxu0 0
        %475 = vmatprep.subr.bf16.mxu0 0
        %476 = vmatpush2.bf16.msra.mxu0 0
        %477 = vmatprep.mubr.bf16.mxu0 0
        %478 = vmatmul.mubr.bf16.gmra.mxu0 %v373
        %v479 = vpop.f32.mrf.mxu0
        %v480 = vadd.f32 %v395, %v479
        %v481 = vpop.f32.mrf.mxu0
        %v482 = vpop.f32.mrf.mxu0
        %v483 = vpop.f32.mrf.mxu0
        %484 = vdwg.mxu0
        %v485 = vmax.f32 %v480, 0.0
        %v486 = vld [vmem:[#allocation2] sm:$0xff]
        %v487 = vld [vmem:[#allocation2 + $0x8] sm:$0xff]
        %v488 = vpack.c.bf16 %v485, %v485
        %v489 = vld [vmem:[%s323] sm:$0xff]
        %v490 = vld [vmem:[%s323 + $0x8] sm:$0xff]
        %v491 = vld [vmem:[%s323 + $0x10] sm:$0xff]
        %v492 = vld [vmem:[%s323 + $0x18] sm:$0xff]
        %v493 = vld [vmem:[%s323 + $0x20] sm:$0xff]
        %v494 = vld [vmem:[%s323 + $0x28] sm:$0xff]
        %v495 = vld [vmem:[%s323 + $0x30] sm:$0xff]
        %v496 = vld [vmem:[%s323 + $0x38] sm:$0xff]
        %v497 = vld [vmem:[%s323 + $0x40] sm:$0xff]
        %v498 = vld [vmem:[%s323 + $0x48] sm:$0xff]
        %v499 = vld [vmem:[%s323 + $0x50] sm:$0xff]
        %v500 = vld [vmem:[%s323 + $0x58] sm:$0xff]
        %v501 = vld [vmem:[%s323 + $0x60] sm:$0xff]
        %v502 = vld [vmem:[%s323 + $0x68] sm:$0xff]
        %v503 = vld [vmem:[%s323 + $0x70] sm:$0xff]
        %v504 = vld [vmem:[%s323 + $0x78] sm:$0xff]
        %v521 = vunpack.c.l.b16 %v489
        %v522 = vunpack.c.h.b16 %v489
        %v523 = vunpack.c.l.b16 %v490
        %v524 = vunpack.c.h.b16 %v490
        %v525 = vunpack.c.l.b16 %v491
        %v526 = vunpack.c.h.b16 %v491
        %v527 = vunpack.c.l.b16 %v492
        %v528 = vunpack.c.h.b16 %v492
        %v529 = vunpack.c.l.b16 %v493
        %v530 = vunpack.c.h.b16 %v493
        %v531 = vunpack.c.l.b16 %v494
        %v532 = vunpack.c.h.b16 %v494
        %v533 = vunpack.c.l.b16 %v495
        %v534 = vunpack.c.h.b16 %v495
        %v535 = vunpack.c.l.b16 %v496
        %v536 = vunpack.c.h.b16 %v496
        %v537 = vunpack.c.l.b16 %v497
        %v538 = vunpack.c.h.b16 %v497
        %v539 = vunpack.c.l.b16 %v498
        %v540 = vunpack.c.h.b16 %v498
        %v541 = vunpack.c.l.b16 %v499
        %v542 = vunpack.c.h.b16 %v499
        %v543 = vunpack.c.l.b16 %v500
        %v544 = vunpack.c.h.b16 %v500
        %v545 = vunpack.c.l.b16 %v501
        %v546 = vunpack.c.h.b16 %v501
        %v547 = vunpack.c.l.b16 %v502
        %v548 = vunpack.c.h.b16 %v502
        %v549 = vunpack.c.l.b16 %v503
        %v550 = vunpack.c.h.b16 %v503
        %v551 = vunpack.c.l.b16 %v504
        %v552 = vunpack.c.h.b16 %v504
        %v553 = vpack.c.b16 %v523, %v521
        %v554 = vpack.c.b16 %v524, %v522
        %v555 = vpack.c.b16 %v527, %v525
        %v556 = vpack.c.b16 %v528, %v526
        %v557 = vpack.c.b16 %v531, %v529
        %v558 = vpack.c.b16 %v532, %v530
        %v559 = vpack.c.b16 %v535, %v533
        %v560 = vpack.c.b16 %v536, %v534
        %v561 = vpack.c.b16 %v539, %v537
        %v562 = vpack.c.b16 %v540, %v538
        %v563 = vpack.c.b16 %v543, %v541
        %v564 = vpack.c.b16 %v544, %v542
        %v565 = vpack.c.b16 %v547, %v545
        %v566 = vpack.c.b16 %v548, %v546
        %v567 = vpack.c.b16 %v551, %v549
        %v568 = vpack.c.b16 %v552, %v550
        %585 = vmatprep.subr.bf16.mxu0 %v568
        %586 = vmatpush1.bf16.msra.mxu0 %v567
        %587 = vmatprep.subr.bf16.mxu0 %v566
        %588 = vmatpush1.bf16.msra.mxu0 %v565
        %589 = vmatprep.subr.bf16.mxu0 %v564
        %590 = vmatpush1.bf16.msra.mxu0 %v563
        %591 = vmatprep.subr.bf16.mxu0 %v562
        %592 = vmatpush1.bf16.msra.mxu0 %v561
        %593 = vmatprep.subr.bf16.mxu0 %v560
        %594 = vmatpush1.bf16.msra.mxu0 %v559
        %595 = vmatprep.subr.bf16.mxu0 %v558
        %596 = vmatpush1.bf16.msra.mxu0 %v557
        %597 = vmatprep.subr.bf16.mxu0 %v556
        %598 = vmatpush1.bf16.msra.mxu0 %v555
        %599 = vmatprep.subr.bf16.mxu0 %v554
        %600 = vmatpush1.bf16.msra.mxu0 %v553
        %601 = vmatprep.subr.bf16.mxu0 0
        %602 = vmatpush2.bf16.msra.mxu0 0
        %603 = vmatprep.subr.bf16.mxu0 0
        %604 = vmatpush2.bf16.msra.mxu0 0
        %605 = vmatprep.subr.bf16.mxu0 0
        %606 = vmatpush2.bf16.msra.mxu0 0
        %607 = vmatprep.subr.bf16.mxu0 0
        %608 = vmatpush2.bf16.msra.mxu0 0
        %609 = vmatprep.subr.bf16.mxu0 0
        %610 = vmatpush2.bf16.msra.mxu0 0
        %611 = vmatprep.subr.bf16.mxu0 0
        %612 = vmatpush2.bf16.msra.mxu0 0
        %613 = vmatprep.subr.bf16.mxu0 0
        %614 = vmatpush2.bf16.msra.mxu0 0
        %615 = vmatprep.subr.bf16.mxu0 0
        %616 = vmatpush2.bf16.msra.mxu0 0
        %617 = vmatprep.mubr.bf16.mxu0 0
        %618 = vmatmul.mubr.bf16.gmra.mxu0 %v488
        %v619 = vpop.f32.mrf.mxu0
        %v620 = vadd.f32 0.0, %v619
        %v621 = vpop.f32.mrf.mxu0
        %v622 = vadd.f32 0.0, %v621
        %v623 = vpop.f32.mrf.mxu0
        %v624 = vpop.f32.mrf.mxu0
        %625 = vdwg.mxu0
        %v626 = vadd.f32 %v486, %v620
        %v627 = vadd.f32 %v487, %v622
        %628 = vst [vmem:[#allocation2] sm:$0xff] %v626
        %629 = vst [vmem:[#allocation2 + $0x8] sm:$0xff] %v627
        %p630 = scmp.eq.s32.totalorder %s24, 1
        // Predicated region
        $region69: #{tpu_custom_call.1} parent=47 // pred_check
          %p631 = pneg %p630
        $region70: #{tpu_custom_call.1} parent=47 // pred_check_branch
          %633 = sbr.rel (%p631) target = $region72
        $region71: #{tpu_custom_call.1} parent=47 // pred_region
          %v634 = vld [vmem:[#allocation2] sm:$0xff]
          %v635 = vld [vmem:[#allocation2 + $0x8] sm:$0xff]
          %v636 = vld [vmem:[%s4] sm:$0x3]
          %v638 = vlaneseq
          %v639 = vshrl.u32 %v638, 7
          %v640 = vsub.s32 0, %v639
          %v641 = vrot.slane %v636, %v640
          %v642 = vlaneseq
          %v643 = vshrl.u32 %v642, 7
          %v644 = vsub.s32 1, %v643
          %v645 = vrot.slane %v636, %v644
          %v648 = vadd.f32 %v634, %v641
          %v649 = vadd.f32 %v635, %v645
          %v650 = vmax.f32 %v648, 0.0
          %v651 = vmax.f32 %v649, 0.0
          %v652 = vpack.c.bf16 %v650, %v650
          %v653 = vpack.c.bf16 %v651, %v651
          %v654 = vld [vmem:[#allocation9] sm:$0xf]
          %v655 = vld [vmem:[#allocation9 + $0x4] sm:$0xf]
          %v656 = vld [vmem:[#allocation9 + $0x8] sm:$0xf]
          %v657 = vld [vmem:[#allocation9 + $0xc] sm:$0xf]
          %v658 = vld [vmem:[#allocation9 + $0x10] sm:$0xf]
          %v659 = vld [vmem:[#allocation9 + $0x14] sm:$0xf]
          %v660 = vld [vmem:[#allocation9 + $0x18] sm:$0xf]
          %v661 = vld [vmem:[#allocation9 + $0x1c] sm:$0xf]
          %v662 = vld [vmem:[#allocation9 + $0x20] sm:$0xf]
          %v663 = vld [vmem:[#allocation9 + $0x24] sm:$0xf]
          %v664 = vld [vmem:[#allocation9 + $0x28] sm:$0xf]
          %v665 = vld [vmem:[#allocation9 + $0x2c] sm:$0xf]
          %v666 = vld [vmem:[#allocation9 + $0x30] sm:$0xf]
          %v667 = vld [vmem:[#allocation9 + $0x34] sm:$0xf]
          %v668 = vld [vmem:[#allocation9 + $0x38] sm:$0xf]
          %v669 = vld [vmem:[#allocation9 + $0x3c] sm:$0xf]
          %v670 = vld [vmem:[#allocation9 + $0x40] sm:$0xf]
          %v671 = vld [vmem:[#allocation9 + $0x44] sm:$0xf]
          %v672 = vld [vmem:[#allocation9 + $0x48] sm:$0xf]
          %v673 = vld [vmem:[#allocation9 + $0x4c] sm:$0xf]
          %v674 = vld [vmem:[#allocation9 + $0x50] sm:$0xf]
          %v675 = vld [vmem:[#allocation9 + $0x54] sm:$0xf]
          %v676 = vld [vmem:[#allocation9 + $0x58] sm:$0xf]
          %v677 = vld [vmem:[#allocation9 + $0x5c] sm:$0xf]
          %v678 = vld [vmem:[#allocation9 + $0x60] sm:$0xf]
          %v679 = vld [vmem:[#allocation9 + $0x64] sm:$0xf]
          %v680 = vld [vmem:[#allocation9 + $0x68] sm:$0xf]
          %v681 = vld [vmem:[#allocation9 + $0x6c] sm:$0xf]
          %v682 = vld [vmem:[#allocation9 + $0x70] sm:$0xf]
          %v683 = vld [vmem:[#allocation9 + $0x74] sm:$0xf]
          %v684 = vld [vmem:[#allocation9 + $0x78] sm:$0xf]
          %v685 = vld [vmem:[#allocation9 + $0x7c] sm:$0xf]
          %v686 = vld [vmem:[%s6] sm:$0x1]
          %v688 = vlaneseq
          %v689 = vshrl.u32 %v688, 7
          %v690 = vsub.s32 0, %v689
          %v691 = vrot.slane %v686, %v690
          %v725 = vunpack.c.l.b16 %v654
          %v726 = vunpack.c.l.b16 %v655
          %v727 = vunpack.c.l.b16 %v656
          %v728 = vunpack.c.l.b16 %v657
          %v729 = vunpack.c.l.b16 %v658
          %v730 = vunpack.c.l.b16 %v659
          %v731 = vunpack.c.l.b16 %v660
          %v732 = vunpack.c.l.b16 %v661
          %v733 = vunpack.c.l.b16 %v662
          %v734 = vunpack.c.l.b16 %v663
          %v735 = vunpack.c.l.b16 %v664
          %v736 = vunpack.c.l.b16 %v665
          %v737 = vunpack.c.l.b16 %v666
          %v738 = vunpack.c.l.b16 %v667
          %v739 = vunpack.c.l.b16 %v668
          %v740 = vunpack.c.l.b16 %v669
          %v741 = vunpack.c.l.b16 %v670
          %v742 = vunpack.c.l.b16 %v671
          %v743 = vunpack.c.l.b16 %v672
          %v744 = vunpack.c.l.b16 %v673
          %v745 = vunpack.c.l.b16 %v674
          %v746 = vunpack.c.l.b16 %v675
          %v747 = vunpack.c.l.b16 %v676
          %v748 = vunpack.c.l.b16 %v677
          %v749 = vunpack.c.l.b16 %v678
          %v750 = vunpack.c.l.b16 %v679
          %v751 = vunpack.c.l.b16 %v680
          %v752 = vunpack.c.l.b16 %v681
          %v753 = vunpack.c.l.b16 %v682
          %v754 = vunpack.c.l.b16 %v683
          %v755 = vunpack.c.l.b16 %v684
          %v756 = vunpack.c.l.b16 %v685
          %v757 = vpack.c.b16 %v726, %v725
          %v758 = vpack.c.b16 %v728, %v727
          %v759 = vpack.c.b16 %v730, %v729
          %v760 = vpack.c.b16 %v732, %v731
          %v761 = vpack.c.b16 %v734, %v733
          %v762 = vpack.c.b16 %v736, %v735
          %v763 = vpack.c.b16 %v738, %v737
          %v764 = vpack.c.b16 %v740, %v739
          %v765 = vpack.c.b16 %v742, %v741
          %v766 = vpack.c.b16 %v744, %v743
          %v767 = vpack.c.b16 %v746, %v745
          %v768 = vpack.c.b16 %v748, %v747
          %v769 = vpack.c.b16 %v750, %v749
          %v770 = vpack.c.b16 %v752, %v751
          %v771 = vpack.c.b16 %v754, %v753
          %v772 = vpack.c.b16 %v756, %v755
          %789 = vmatprep.subr.bf16.mxu0 0
          %790 = vmatpush1.bf16.msra.mxu0 %v764
          %791 = vmatprep.subr.bf16.mxu0 0
          %792 = vmatpush1.bf16.msra.mxu0 %v763
          %793 = vmatprep.subr.bf16.mxu0 0
          %794 = vmatpush1.bf16.msra.mxu0 %v762
          %795 = vmatprep.subr.bf16.mxu0 0
          %796 = vmatpush1.bf16.msra.mxu0 %v761
          %797 = vmatprep.subr.bf16.mxu0 0
          %798 = vmatpush1.bf16.msra.mxu0 %v760
          %799 = vmatprep.subr.bf16.mxu0 0
          %800 = vmatpush1.bf16.msra.mxu0 %v759
          %801 = vmatprep.subr.bf16.mxu0 0
          %802 = vmatpush1.bf16.msra.mxu0 %v758
          %803 = vmatprep.subr.bf16.mxu0 0
          %804 = vmatpush1.bf16.msra.mxu0 %v757
          %805 = vmatprep.subr.bf16.mxu0 0
          %806 = vmatpush2.bf16.msra.mxu0 %v772
          %807 = vmatprep.subr.bf16.mxu0 0
          %808 = vmatpush2.bf16.msra.mxu0 %v771
          %809 = vmatprep.subr.bf16.mxu0 0
          %810 = vmatpush2.bf16.msra.mxu0 %v770
          %811 = vmatprep.subr.bf16.mxu0 0
          %812 = vmatpush2.bf16.msra.mxu0 %v769
          %813 = vmatprep.subr.bf16.mxu0 0
          %814 = vmatpush2.bf16.msra.mxu0 %v768
          %815 = vmatprep.subr.bf16.mxu0 0
          %816 = vmatpush2.bf16.msra.mxu0 %v767
          %817 = vmatprep.subr.bf16.mxu0 0
          %818 = vmatpush2.bf16.msra.mxu0 %v766
          %819 = vmatprep.subr.bf16.mxu0 0
          %820 = vmatpush2.bf16.msra.mxu0 %v765
          %821 = vmatprep.mubr.bf16.mxu0 %v653
          %822 = vmatmul.mubr.bf16.gmra.mxu0 %v652
          %v823 = vpop.f32.mrf.mxu0
          %v824 = vadd.f32 %v691, %v823
          %v825 = vpop.f32.mrf.mxu0
          %v826 = vpop.f32.mrf.mxu0
          %v827 = vpop.f32.mrf.mxu0
          %828 = vdwg.mxu0
          %829 = vst [vmem:[#allocation11] sm:$0xff] %v824
        $region72: #{tpu_custom_call.1} parent=47 // pred_fallthru
          _
        // Predicated region
        $region73: #{tpu_custom_call.1} parent=47 // pred_check
          %p830 = pneg %p199
        $region74: #{tpu_custom_call.1} parent=47 // pred_check_branch
          %832 = sbr.rel (%p830) target = $region76
        $region75: #{tpu_custom_call.1} parent=47 // pred_region
          %s834 = ssub.s32 128, 128
          %835 = vsyncadd [#allocation5], %s834
          %s837 = sshll.u32 [#allocation11], 4
          %s838 = int_to_ptr.vmem [resolvable:$true] %s837
          %840 = dma.vmem_to_hbm [thread:$0]  %s838, 128, %s7, [#allocation5]
        $region76: #{tpu_custom_call.1} parent=47 // pred_fallthru
          _
        // Predicated region
        $region77: #{tpu_custom_call.1} parent=47 // pred_check
          %p841 = pneg %p199
        $region78: #{tpu_custom_call.1} parent=47 // pred_check_branch
          %843 = sbr.rel (%p841) target = $region80
        $region79: #{tpu_custom_call.1} parent=47 // pred_region
          %844 = dma.done [#allocation5], 128
        $region80: #{tpu_custom_call.1} parent=47 // pred_fallthru
          _
      $region48: #{tpu_custom_call.1} parent=5 // pred_fallthru
        _
      %p845 = scmp.le.s32.totalorder 2, %s19
      // Predicated region
      $region81: #{tpu_custom_call.1} parent=5 // pred_check
        %p846 = pneg %p845
      $region82: #{tpu_custom_call.1} parent=5 // pred_check_branch
        %848 = sbr.rel (%p846) target = $region84
      $region83: #{tpu_custom_call.1} parent=5 // pred_region
        %s849 = ssub.s32 %s19, 2
      $region84: #{tpu_custom_call.1} parent=5 // pred_fallthru
        _
    $region6: #{tpu_custom_call.1} parent=1 // loop_footer
      %s23 = sadd.s32 1, %s19
    $region7: #{tpu_custom_call.1} parent=1 // loop_footer_branch
      %18 = sbr.rel target = $region3
    $region8: #{tpu_custom_call.1} parent=1 // loop_exit
      _
    %850 = vsyncpa [#allocation4], 1
    %s851 = scalar_lea.sflag [#allocation4], 1
    %852 = vsyncpa %s851, 1
    %853 = vsyncpa [#allocation7], 1
    %s854 = scalar_lea.sflag [#allocation7], 1
    %855 = vsyncpa %s854, 1
    %856 = vsyncpa [#allocation10], 1
    %857 = vsyncpa [#allocation5], 1
    %s858 = scalar_lea.sflag [#allocation5], 1
    %859 = vsyncpa %s858, 1

</llo_original>
